<compile_context>
chip_gen: v6e
topology: v6e:2x2x1
jax: 0.10.0
libtpu: 0.0.40
codegen_flags: <defaults>
</compile_context>

<pallas_src>
import jax
import jax.numpy as jnp
from jax.experimental import pallas as pl
from jax.experimental.pallas import tpu as pltpu

IMAGENET_MEAN = (0.485, 0.456, 0.406)
IMAGENET_STD = (0.229, 0.224, 0.225)


def _ceil_to(x, m):
    return ((x + m - 1) // m) * m


def _pick_tile(total, cap, unit):
    """Largest multiple of `unit` <= min(cap, total) that divides `total`.

    `total` must itself be a multiple of `unit`."""
    t = min(cap, total)
    t = max((t // unit) * unit, unit)
    while total % t:
        t -= unit
    return t


def _per_feature_norm_consts(c, h, w):
    """Per-feature mean and 1/std for a flattened (C*H*W,) feature vector."""
    assert c == 3, "ImageNet normalization expects 3 channels"
    hw = h * w
    mean_c = jnp.asarray(IMAGENET_MEAN, dtype=jnp.float32)
    istd_c = jnp.asarray([1.0 / s for s in IMAGENET_STD], dtype=jnp.float32)
    mean = jnp.repeat(mean_c, hw)          # (C*H*W,)
    istd = jnp.repeat(istd_c, hw)          # (C*H*W,)
    return mean, istd


# ---------------------------------------------------------------------------
# Kernel 1 (general path): standalone per-channel normalization, lane-dense,
# large 2-D blocks (HBM-bandwidth bound elementwise op).
# ---------------------------------------------------------------------------
def _normalize_kernel(x_ref, mean_ref, istd_ref, o_ref):
    # x block (tr, td); mean/istd blocks (1, td) broadcast over sublanes.
    o_ref[...] = ((x_ref[...] - mean_ref[...]) * istd_ref[...]).astype(o_ref.dtype)


def imagenet_normalize(x, *, row_tile_cap=256, lane_tile_cap=4096):
    """x: (N, 3, H, W) float32 (NCHW) -> (x - mean) / std, same shape/dtype."""
    n, c, h, w = x.shape
    d = c * h * w
    mean, istd = _per_feature_norm_consts(c, h, w)

    d_pad = _ceil_to(d, 128)
    m_pad8 = _ceil_to(max(n, 8), 8)
    tr = _pick_tile(m_pad8, row_tile_cap, 8)
    m_pad = _ceil_to(m_pad8, tr)
    td = _pick_tile(d_pad, lane_tile_cap, 128)

    x2d = x.reshape(n, d)
    if (m_pad, d_pad) != (n, d):
        x2d = jnp.pad(x2d, ((0, m_pad - n), (0, d_pad - d)))
    mean2d = jnp.pad(mean, (0, d_pad - d)).reshape(1, d_pad)
    istd2d = jnp.pad(istd, (0, d_pad - d)).reshape(1, d_pad)

    out = pl.pallas_call(
        _normalize_kernel,
        out_shape=jax.ShapeDtypeStruct((m_pad, d_pad), x.dtype),
        grid=(m_pad // tr, d_pad // td),
        in_specs=[
            pl.BlockSpec((tr, td), lambda i, j: (i, j)),
            pl.BlockSpec((1, td), lambda i, j: (0, j)),
            pl.BlockSpec((1, td), lambda i, j: (0, j)),
        ],
        out_specs=pl.BlockSpec((tr, td), lambda i, j: (i, j)),
        compiler_params=pltpu.CompilerParams(
            dimension_semantics=("parallel", "parallel"),
            vmem_limit_bytes=32 * 1024 * 1024,
        ),
    )(x2d, mean2d, istd2d)
    return out[:n, :d].reshape(n, c, h, w)


# ---------------------------------------------------------------------------
# Kernel 2 (fast path): normalization folded into the linear layer's weights,
# so the kernel is a pure K-tiled matmul + bias with an f32 VMEM accumulator.
# ---------------------------------------------------------------------------
def _matmul_bias_kernel(x_ref, w_ref, b_ref, o_ref, acc_ref):
    k = pl.program_id(2)

    @pl.when(k == 0)
    def _():
        acc_ref[...] = jnp.zeros_like(acc_ref)

    acc_ref[...] += jnp.dot(x_ref[...].astype(w_ref.dtype), w_ref[...],
                            preferred_element_type=jnp.float32)

    @pl.when(k == pl.num_programs(2) - 1)
    def _():
        o_ref[...] = (acc_ref[...] + b_ref[...]).astype(o_ref.dtype)


def fused_normalize_linear(x, w, b, *, tm_cap=256, tn_cap=256, tk_cap=512,
                           mxu_dtype=jnp.bfloat16, out_dtype=jnp.float32):
    """ImageNet-normalize -> flatten -> linear head as ONE matmul kernel.

    x: (N, 3, H, W) f32; w: (C*H*W, dout); b: (dout,).
    Normalization is affine in x, so it is absorbed into w/b in f32 at trace
    time; weights are then cast to `mxu_dtype` (bf16 default: MXU-native on
    all generations, halves weight HBM traffic).  Set out_dtype=jnp.bfloat16
    to also halve output store traffic when downstream allows it.
    """
    n, c, h, wd = x.shape
    d = c * h * wd
    dout = w.shape[1]
    mean, istd = _per_feature_norm_consts(c, h, wd)

    # Fold normalization into the weights/bias (f32, before any cast).
    w32 = jnp.asarray(w, jnp.float32)
    b32 = jnp.asarray(b, jnp.float32)
    w_fold = istd[:, None] * w32
    b_fold = b32 - (mean * istd) @ w32

    # Tiling / padding: M toward MXU-native height, N/K lane-aligned,
    # zero-padded (not asserted) so arbitrary shapes work.
    m_pad8 = _ceil_to(max(n, 8), 8)
    tm = _pick_tile(m_pad8, tm_cap, 8)
    m_pad = _ceil_to(m_pad8, tm)
    n_pad = _ceil_to(dout, 128)
    tn = _pick_tile(n_pad, tn_cap, 128)
    k_pad = _ceil_to(d, 128)
    tk = _pick_tile(k_pad, tk_cap, 128)

    x2d = x.reshape(n, d).astype(jnp.float32)
    if (m_pad, k_pad) != (n, d):
        x2d = jnp.pad(x2d, ((0, m_pad - n), (0, k_pad - d)))
    w_fold = jnp.pad(w_fold, ((0, k_pad - d), (0, n_pad - dout))).astype(mxu_dtype)
    b2d = jnp.pad(b_fold, (0, n_pad - dout)).reshape(1, n_pad)

    grid = (m_pad // tm, n_pad // tn, k_pad // tk)   # reduction axis (K) last
    out = pl.pallas_call(
        _matmul_bias_kernel,
        out_shape=jax.ShapeDtypeStruct((m_pad, n_pad), out_dtype),
        grid_spec=pltpu.PrefetchScalarGridSpec(
            num_scalar_prefetch=0,
            grid=grid,
            in_specs=[
                pl.BlockSpec((tm, tk), lambda i, j, k: (i, k)),   # x
                pl.BlockSpec((tk, tn), lambda i, j, k: (k, j)),   # folded w
                pl.BlockSpec((1, tn), lambda i, j, k: (0, j)),    # folded b
            ],
            out_specs=pl.BlockSpec((tm, tn), lambda i, j, k: (i, j)),
            scratch_shapes=[pltpu.VMEM((tm, tn), jnp.float32)],
        ),
        compiler_params=pltpu.CompilerParams(
            dimension_semantics=("parallel", "parallel", "arbitrary"),
            vmem_limit_bytes=48 * 1024 * 1024,   # fits v5e/v6e/v7x budgets
        ),
    )(x2d, w_fold, b2d)
    return out[:n, :dout]


# ---------------------------------------------------------------------------
# BaseNormModel equivalent
# ---------------------------------------------------------------------------
class LinearHead:
    """Deterministic synthetic inner model: flatten -> x @ w + b."""
    # TODO(synk): the original wrapped `model` is an arbitrary nn.Module; this
    # linear head stands in for it so the full forward can be exercised.

    def __init__(self, w, b):
        self.w = w
        self.b = b

    def __call__(self, xn):     # general (unfused) path, plain JAX glue
        return xn.reshape(xn.shape[0], -1) @ self.w + self.b.reshape(1, -1)


class BaseNormModelPallas:
    """Pallas equivalent of BaseNormModel: ImageNet-normalize, then model."""

    def __init__(self, model):
        self.model = model

    def __call__(self, x):
        if isinstance(self.model, LinearHead):
            # Fast path: fold the normalization into the model's first linear
            # layer (single pure-matmul pallas_call, bf16 weights on the MXU).
            return fused_normalize_linear(x, self.model.w, self.model.b)
        # General path: standalone lane-dense normalize kernel, then model.
        return self.model(imagenet_normalize(x))


if __name__ == "__main__":
    key = jax.random.PRNGKey(0)
    k_x, k_w, k_b = jax.random.split(key, 3)

    N, C, H, W = 2, 3, 16, 16       # NCHW, like PyTorch
    NUM_CLASSES = 8
    D = C * H * W                   # 768

    x = jax.random.uniform(k_x, (N, C, H, W), dtype=jnp.float32)
    w = jax.random.normal(k_w, (D, NUM_CLASSES), dtype=jnp.float32) * 0.02
    b = jax.random.normal(k_b, (NUM_CLASSES,), dtype=jnp.float32) * 0.01

    model = BaseNormModelPallas(LinearHead(w, b))
    out = model(x)                  # fused path, bf16 weights on the MXU
    jax.block_until_ready(out)

    # Pure-JAX references.
    mean4 = jnp.asarray(IMAGENET_MEAN, jnp.float32).reshape(1, 3, 1, 1)
    std4 = jnp.asarray(IMAGENET_STD, jnp.float32).reshape(1, 3, 1, 1)
    xn_ref = (x - mean4) / std4
    out_ref = xn_ref.reshape(N, -1) @ w + b.reshape(1, -1)

    # (a) standalone normalize kernel (general-path building block).
    xn_pal = imagenet_normalize(x)
    assert xn_pal.shape == x.shape
    assert jnp.allclose(xn_pal, xn_ref, atol=1e-5, rtol=1e-5), "normalize mismatch"

    # (b) fused matmul with f32 weights: near-exact check of the fold.
    out_f32 = fused_normalize_linear(x, w, b, mxu_dtype=jnp.float32)
    assert jnp.allclose(out_f32, out_ref, atol=1e-3, rtol=1e-3), "fused f32 mismatch"

    # (c) default (bf16-weight) path used by the model wrapper.
    assert out.shape == (N, NUM_CLASSES)
    assert jnp.allclose(out, out_ref, atol=5e-2, rtol=5e-2), "fused bf16 mismatch"

    print("KERNEL_OK")
</pallas_src>

<mosaic_0001>
module attributes {stable_mosaic.version = 11 : i64} {
  func.func @_matmul_bias_kernel(%arg0: i32, %arg1: i32, %arg2: i32, %arg3: memref<8x384xf32, #tpu.memory_space<vmem>>, %arg4: memref<384x128xbf16, #tpu.memory_space<vmem>>, %arg5: memref<1x128xf32, #tpu.memory_space<vmem>>, %arg6: memref<8x128xf32, #tpu.memory_space<vmem>>, %arg7: memref<8x128xf32, #tpu.memory_space<vmem>>) attributes {dimension_semantics = [#tpu.dimension_semantics<parallel>, #tpu.dimension_semantics<parallel>, #tpu.dimension_semantics<arbitrary>], iteration_bounds = array<i64: 1, 1, 2>, scalar_prefetch = 0 : i64, scratch_operands = 1 : i64, tpu.core_type = #tpu.core_type<tc>, window_params = [{transform_indices = @transform_0, window_bounds = array<i64: 8, 384>}, {transform_indices = @transform_1, window_bounds = array<i64: 384, 128>}, {transform_indices = @transform_2, window_bounds = array<i64: 1, 128>}, {transform_indices = @transform_3, window_bounds = array<i64: 8, 128>}]} {
    %c0_i32 = arith.constant 0 : i32
    %0 = arith.cmpi eq, %arg2, %c0_i32 : i32
    %1 = arith.extui %0 : i1 to i32
    %c0_i32_0 = arith.constant 0 : i32
    %2 = arith.cmpi ne, %1, %c0_i32_0 : i32
    scf.if %2 {
      %cst_9 = arith.constant 0.000000e+00 : f32
      %13 = vector.broadcast %cst_9 : f32 to vector<8x128xf32>
      %c0_10 = arith.constant 0 : index
      %c0_11 = arith.constant 0 : index
      %14 = vector.load %arg7[%c0_10, %c0_11] : memref<8x128xf32, #tpu.memory_space<vmem>>, vector<8x128xf32>
      tpu.vector_store %arg7[%c0_10, %c0_11], %13 {strides = array<i32>} : memref<8x128xf32, #tpu.memory_space<vmem>>, vector<8x128xf32>,
    } else {
    }
    %c0 = arith.constant 0 : index
    %c0_1 = arith.constant 0 : index
    %3 = vector.load %arg7[%c0, %c0_1] : memref<8x128xf32, #tpu.memory_space<vmem>>, vector<8x128xf32>
    %c0_2 = arith.constant 0 : index
    %c0_3 = arith.constant 0 : index
    %4 = vector.load %arg3[%c0_2, %c0_3] : memref<8x384xf32, #tpu.memory_space<vmem>>, vector<8x384xf32>
    %5 = arith.truncf %4 : vector<8x384xf32> to vector<8x384xbf16>
    %c0_4 = arith.constant 0 : index
    %c0_5 = arith.constant 0 : index
    %6 = vector.load %arg4[%c0_4, %c0_5] : memref<384x128xbf16, #tpu.memory_space<vmem>>, vector<384x128xbf16>
    %cst = arith.constant dense<0.000000e+00> : vector<8x128xf32>
    %7 = tpu.matmul %5, %6, %cst {dimension_numbers = #tpu.dot_dimension_numbers<[1], [0], [0], [1], [0, 0, 1, 1], [], []>} : vector<8x384xbf16>, vector<384x128xbf16>, vector<8x128xf32> -> vector<8x128xf32>
    %8 = arith.addf %3, %7 : vector<8x128xf32>
    %c0_6 = arith.constant 0 : index
    %c0_7 = arith.constant 0 : index
    %9 = vector.load %arg7[%c0_6, %c0_7] : memref<8x128xf32, #tpu.memory_space<vmem>>, vector<8x128xf32>
    tpu.vector_store %arg7[%c0_6, %c0_7], %8 {strides = array<i32>} : memref<8x128xf32, #tpu.memory_space<vmem>>, vector<8x128xf32>,
    %c1_i32 = arith.constant 1 : i32
    %10 = arith.cmpi eq, %arg2, %c1_i32 : i32
    %11 = arith.extui %10 : i1 to i32
    %c0_i32_8 = arith.constant 0 : i32
    %12 = arith.cmpi ne, %11, %c0_i32_8 : i32
    scf.if %12 {
      %c0_9 = arith.constant 0 : index
      %c0_10 = arith.constant 0 : index
      %13 = vector.load %arg7[%c0_9, %c0_10] : memref<8x128xf32, #tpu.memory_space<vmem>>, vector<8x128xf32>
      %c0_11 = arith.constant 0 : index
      %c0_12 = arith.constant 0 : index
      %14 = vector.load %arg5[%c0_11, %c0_12] : memref<1x128xf32, #tpu.memory_space<vmem>>, vector<1x128xf32>
      %15 = vector.broadcast %14 : vector<1x128xf32> to vector<8x128xf32>
      %16 = arith.addf %13, %15 : vector<8x128xf32>
      %c0_13 = arith.constant 0 : index
      %c0_14 = arith.constant 0 : index
      %17 = vector.load %arg6[%c0_13, %c0_14] : memref<8x128xf32, #tpu.memory_space<vmem>>, vector<8x128xf32>
      tpu.vector_store %arg6[%c0_13, %c0_14], %16 {strides = array<i32>} : memref<8x128xf32, #tpu.memory_space<vmem>>, vector<8x128xf32>,
    } else {
    }
    return
  }
  func.func @transform_0(%arg0: i32, %arg1: i32, %arg2: i32) -> (i32, i32) {
    %c0_i32 = arith.constant 0 : i32
    return %arg0, %arg2 : i32, i32
  }
  func.func @transform_1(%arg0: i32, %arg1: i32, %arg2: i32) -> (i32, i32) {
    %c0_i32 = arith.constant 0 : i32
    return %arg2, %arg1 : i32, i32
  }
  func.func @transform_2(%arg0: i32, %arg1: i32, %arg2: i32) -> (i32, i32) {
    %c0_i32 = arith.constant 0 : i32
    %c0_i32_0 = arith.constant 0 : i32
    return %c0_i32, %arg1 : i32, i32
  }
  func.func @transform_3(%arg0: i32, %arg1: i32, %arg2: i32) -> (i32, i32) {
    %c0_i32 = arith.constant 0 : i32
    return %arg0, %arg1 : i32, i32
  }
}

</mosaic_0001>

<llo_original>
// kernel: tpu_custom_call.1
$region0: #{tpu_custom_call.1}
  #allocation0 [shape = 'u32[]', space=smem, size = 0x4, offset = 0x4, fixed_abs, tag = 'smem constant byte address 0x4 - core index']
  #allocation1 [shape = 'u32[144,128]{1,0:T(1,128)}', space=vmem, size = 0x12000, scoped, tag = 'internal scratch']
  #allocation2 [shape = 'f32[8,128]{1,0:T(8,128)}', space=vmem, size = 0x1000, scoped, tag = 'scratch operand']
  %s0 = inlined_call_operand.hbm [shape: f32[8,768], index: 0, kind: input, shape index: {}]
  %s1 = inlined_call_operand.hbm [shape: bf16[768,128], index: 1, kind: input, shape index: {}]
  %s2 = inlined_call_operand.vmem [shape: f32[1,128], index: 2, kind: input, shape index: {}]
  %s3 = inlined_call_operand.hbm [shape: f32[8,128], index: 3, kind: output, shape index: {}]
  %s4 = sld [smem:[#allocation0]]
  $region61: #{tpu_custom_call.1} parent=0
    _
  %s6 = ssub.s32 1, %s4
  %s7 = scalar_select 0, %s6, %s4
  $region1: #{tpu_custom_call.1} parent=0
    #allocation3 [shape = 'u8[24576]{0}', space=vmem, size = 0x6000, scoped, tag = 'input window, operand 0']
    #allocation4 [shape = 's32[2]{0}', space=sflag, size = 0x8, scoped, tag = 'scoped memory for tpu_custom_call.1']
    #allocation5 [shape = 's32[2]{0}', space=sflag, size = 0x8, scoped, tag = 'scoped memory for tpu_custom_call.1']
    #allocation6 [shape = 'u8[196608]{0}', space=vmem, size = 0x30000, scoped, tag = 'input window, operand 1']
    #allocation7 [shape = 's32[2]{0}', space=sflag, size = 0x8, scoped, tag = 'scoped memory for tpu_custom_call.1']
    #allocation8 [shape = 'u8[4096]{0}', space=vmem, size = 0x1000, scoped, tag = 'output window, operand 0, single buffered']
    %8 = vsyncpa [#allocation4], 0
    %s9 = scalar_lea.sflag [#allocation4], 1
    %10 = vsyncpa %s9, 0
    %11 = vsyncpa [#allocation7], 0
    %s12 = scalar_lea.sflag [#allocation7], 1
    %13 = vsyncpa %s12, 0
    %14 = vsyncpa [#allocation5], 0
    loop: start=0, step=1, limit=4
    $region2: #{tpu_custom_call.1} parent=1 // loop_pre_header
      _
    $region3: #{tpu_custom_call.1} parent=1 // loop_header
      %s16 = sphi 0, %s20
      %p17 = scmp.ge.s32.totalorder %s16, 4
      %s23 = sphi 0, %s42
      %s24 = sphi 0, %s38
      %s25 = sphi 0, %s34
      %s26 = sphi 0, %s23
      %s27 = sphi 0, %s24
      %s28 = sphi 0, %s25
      %s29 = sphi 0, %s26
      %s30 = sphi 0, %s27
      %s31 = sphi 0, %s28
      %s47 = sphi 0, %s49
      %s50 = sphi 0, %s47
      %s51 = sphi 0, %s50
      %s67 = sphi 0, %s51
      %s75 = sphi 0, %s77
      %s78 = sphi 0, %s75
      %s79 = sphi 0, %s78
      %s95 = sphi 0, %s79
      %s101 = sphi 0, %s103
      %s104 = sphi 0, %s101
      %s105 = sphi 0, %s104
      %s121 = sphi 0, %s105
      %s129 = sphi 0, %s131
      %s132 = sphi 0, %s129
      %s133 = sphi 0, %s132
      %s149 = sphi 0, %s133
    $region4: #{tpu_custom_call.1} parent=1 // loop_header_branch
      %19 = sbr.rel (%p17) target = $region8
    $region5: #{tpu_custom_call.1} parent=1 // loop_body
      %s21 = ssub.s32 %s16, 1
      %s22 = ssub.s32 %s16, 2
      %s32 = sadd.s32 1, %s25
      %p33 = scmp.ge.s32.totalorder %s32, 2
      %s34 = scalar_select %p33, 0, %s32
      %s35 = sadd.s32 1, %s24
      %s36 = scalar_select %p33, %s35, %s24
      %p37 = scmp.ge.s32.totalorder %s36, 1
      %s38 = scalar_select %p37, 0, %s36
      %s39 = sadd.s32 1, %s23
      %s40 = scalar_select %p37, %s39, %s23
      %p41 = scmp.ge.s32.totalorder %s40, 1
      %s42 = scalar_select %p41, 0, %s40
      %s43 = ssub.s32 %s23, %s42
      %s44 = ssub.s32 %s25, %s34
      %s45 = sor.u32 %s43, %s44
      %p46 = scmp.eq.s32.totalorder %s45, 0
      %s48 = sadd.s32 %s47, 1
      %s49 = scalar_select %p46, %s47, %s48
      %p52 = pneg %p46
      %p53 = scmp.eq.s32.totalorder %s16, 1
      %p54 = por %p52, %p53
      %p55 = scmp.ne.s32.totalorder %s47, %s50
      %p56 = scmp.eq.s32.totalorder %s16, 0
      %p57 = por %p55, %p56
      %p58 = scmp.ne.s32.totalorder %s47, %s50
      %p59 = scmp.eq.s32.totalorder %s21, 1
      %p60 = por %p58, %p59
      %p61 = scmp.ne.s32.totalorder %s50, %s51
      %p62 = scmp.eq.s32.totalorder %s21, 0
      %p63 = por %p61, %p62
      %p64 = scmp.ne.s32.totalorder %s50, %s51
      %p65 = scmp.eq.s32.totalorder %s22, 1
      %p66 = por %p64, %p65
      %p68 = scmp.ne.s32.totalorder %s51, %s67
      %p69 = scmp.eq.s32.totalorder %s22, 0
      %p70 = por %p68, %p69
      %s71 = ssub.s32 %s25, %s34
      %s72 = ssub.s32 %s24, %s38
      %s73 = sor.u32 %s71, %s72
      %p74 = scmp.eq.s32.totalorder %s73, 0
      %s76 = sadd.s32 %s75, 1
      %s77 = scalar_select %p74, %s75, %s76
      %p80 = pneg %p74
      %p81 = scmp.eq.s32.totalorder %s16, 1
      %p82 = por %p80, %p81
      %p83 = scmp.ne.s32.totalorder %s75, %s78
      %p84 = scmp.eq.s32.totalorder %s16, 0
      %p85 = por %p83, %p84
      %p86 = scmp.ne.s32.totalorder %s75, %s78
      %p87 = scmp.eq.s32.totalorder %s21, 1
      %p88 = por %p86, %p87
      %p89 = scmp.ne.s32.totalorder %s78, %s79
      %p90 = scmp.eq.s32.totalorder %s21, 0
      %p91 = por %p89, %p90
      %p92 = scmp.ne.s32.totalorder %s78, %s79
      %p93 = scmp.eq.s32.totalorder %s22, 1
      %p94 = por %p92, %p93
      %p96 = scmp.ne.s32.totalorder %s79, %s95
      %p97 = scmp.eq.s32.totalorder %s22, 0
      %p98 = por %p96, %p97
      %s99 = ssub.s32 %s24, %s38
      %p100 = scmp.eq.s32.totalorder %s99, 0
      %s102 = sadd.s32 %s101, 1
      %s103 = scalar_select %p100, %s101, %s102
      %p106 = pneg %p100
      %p107 = scmp.eq.s32.totalorder %s16, 1
      %p108 = por %p106, %p107
      %p109 = scmp.ne.s32.totalorder %s101, %s104
      %p110 = scmp.eq.s32.totalorder %s16, 0
      %p111 = por %p109, %p110
      %p112 = scmp.ne.s32.totalorder %s101, %s104
      %p113 = scmp.eq.s32.totalorder %s21, 1
      %p114 = por %p112, %p113
      %p115 = scmp.ne.s32.totalorder %s104, %s105
      %p116 = scmp.eq.s32.totalorder %s21, 0
      %p117 = por %p115, %p116
      %p118 = scmp.ne.s32.totalorder %s104, %s105
      %p119 = scmp.eq.s32.totalorder %s22, 1
      %p120 = por %p118, %p119
      %p122 = scmp.ne.s32.totalorder %s105, %s121
      %p123 = scmp.eq.s32.totalorder %s22, 0
      %p124 = por %p122, %p123
      %s125 = ssub.s32 %s23, %s42
      %s126 = ssub.s32 %s24, %s38
      %s127 = sor.u32 %s125, %s126
      %p128 = scmp.eq.s32.totalorder %s127, 0
      %s130 = sadd.s32 %s129, 1
      %s131 = scalar_select %p128, %s129, %s130
      %p134 = pneg %p128
      %p135 = scmp.eq.s32.totalorder %s16, 1
      %p136 = por %p134, %p135
      %p137 = scmp.ne.s32.totalorder %s129, %s132
      %p138 = scmp.eq.s32.totalorder %s16, 0
      %p139 = por %p137, %p138
      %p140 = scmp.ne.s32.totalorder %s129, %s132
      %p141 = scmp.eq.s32.totalorder %s21, 1
      %p142 = por %p140, %p141
      %p143 = scmp.ne.s32.totalorder %s132, %s133
      %p144 = scmp.eq.s32.totalorder %s21, 0
      %p145 = por %p143, %p144
      %p146 = scmp.ne.s32.totalorder %s132, %s133
      %p147 = scmp.eq.s32.totalorder %s22, 1
      %p148 = por %p146, %p147
      %p150 = scmp.ne.s32.totalorder %s133, %s149
      %p151 = scmp.eq.s32.totalorder %s22, 0
      %p152 = por %p150, %p151
      %p153 = scmp.le.s32.totalorder 1, %s16
      %p154 = scmp.lt.s32.totalorder %s16, 3
      %p155 = pnand %p153, %p154
      %p156 = pneg %p155
      // Predicated region
      $region9: #{tpu_custom_call.1} parent=5 // pred_check
        _
      $region10: #{tpu_custom_call.1} parent=5 // pred_check_branch
        %158 = sbr.rel (%p155) target = $region12
      $region11: #{tpu_custom_call.1} parent=5 // pred_region
        %s159 = ssub.s32 %s16, 1
        // Predicated region
        $region13: #{tpu_custom_call.1} parent=11 // pred_check
          %p160 = pneg %p117
        $region14: #{tpu_custom_call.1} parent=11 // pred_check_branch
          %162 = sbr.rel (%p160) target = $region16
        $region15: #{tpu_custom_call.1} parent=11 // pred_region
          %p163 = scmp.lt.s32.totalorder %s27, 0
          %s164 = scalar_select %p163, %s27, 0
          %s165 = scalar_lea.vmem %s2, %s164
        $region16: #{tpu_custom_call.1} parent=11 // pred_fallthru
          _
      $region12: #{tpu_custom_call.1} parent=5 // pred_fallthru
        _
      %p166 = scmp.lt.s32.totalorder %s16, 2
      // Predicated region
      $region17: #{tpu_custom_call.1} parent=5 // pred_check
        %p167 = pneg %p166
      $region18: #{tpu_custom_call.1} parent=5 // pred_check_branch
        %169 = sbr.rel (%p167) target = $region20
      $region19: #{tpu_custom_call.1} parent=5 // pred_region
        // Predicated region
        $region21: #{tpu_custom_call.1} parent=19 // pred_check
          %p170 = pneg %p57
        $region22: #{tpu_custom_call.1} parent=19 // pred_check_branch
          %172 = sbr.rel (%p170) target = $region24
        $region23: #{tpu_custom_call.1} parent=19 // pred_region
          %s173 = sand.u32 %s47, 1
          %s174 = scalar_lea.sflag [#allocation4], %s173
          %s175 = sand.u32 %s47, 1
          %s176 = smul.addr %s175, 24
          %s177 = scalar_lea.vmem [#allocation3], %s176
          %s178 = smul.u32 3, %s25
          %s180 = ssub.s32 384, 384
          %181 = vsyncadd %s174, %s180
          %s182 = smul.addr %s23, 6
          %s183 = sadd.s32 %s178, %s182
          %s184 = smul.addr %s183, 128
          %s185 = scalar_lea.hbm %s0, %s184
          %s187 = sshll.u32 %s177, 4
          %s188 = int_to_ptr.vmem [resolvable:$true] %s187
          %190 = dma.hbm_to_vmem [thread:$0]  %s185, 384, %s188, %s174
        $region24: #{tpu_custom_call.1} parent=19 // pred_fallthru
          _
        // Predicated region
        $region25: #{tpu_custom_call.1} parent=19 // pred_check
          %p191 = pneg %p85
        $region26: #{tpu_custom_call.1} parent=19 // pred_check_branch
          %193 = sbr.rel (%p191) target = $region28
        $region27: #{tpu_custom_call.1} parent=19 // pred_region
          %s194 = sand.u32 %s75, 1
          %s195 = scalar_lea.sflag [#allocation7], %s194
          %s196 = sand.u32 %s75, 1
          %s197 = smul.addr %s196, 192
          %s198 = scalar_lea.vmem [#allocation6], %s197
          %s199 = smul.u32 48, %s25
          %s201 = ssub.s32 3072, 3072
          %202 = vsyncadd %s195, %s201
          %s203 = sadd.s32 %s24, %s199
          %s204 = smul.addr %s203, 64
          %s205 = scalar_lea.hbm %s1, %s204
          %s206 = sshll.u32 %s198, 4
          %s207 = int_to_ptr.vmem [resolvable:$true] %s206
          %212 = dma.hbm_to_vmem [thread:$0]  %s205, 3072, %s207, %s195, 64, 64, 4
        $region28: #{tpu_custom_call.1} parent=19 // pred_fallthru
          _
      $region20: #{tpu_custom_call.1} parent=5 // pred_fallthru
        _
      %p213 = scmp.le.s32.totalorder 1, %s16
      %p214 = scmp.lt.s32.totalorder %s16, 3
      %p215 = pnand %p213, %p214
      %p216 = pneg %p215
      // Predicated region
      $region29: #{tpu_custom_call.1} parent=5 // pred_check
        _
      $region30: #{tpu_custom_call.1} parent=5 // pred_check_branch
        %218 = sbr.rel (%p215) target = $region32
      $region31: #{tpu_custom_call.1} parent=5 // pred_region
        %s219 = ssub.s32 %s16, 1
        %s220 = sand.u32 %s50, 1
        %s221 = scalar_lea.sflag [#allocation4], %s220
        %s222 = sand.u32 %s50, 1
        %s223 = smul.addr %s222, 24
        %s224 = scalar_lea.vmem [#allocation3], %s223
        // Predicated region
        $region33: #{tpu_custom_call.1} parent=31 // pred_check
          %p225 = pneg %p63
        $region34: #{tpu_custom_call.1} parent=31 // pred_check_branch
          %227 = sbr.rel (%p225) target = $region36
        $region35: #{tpu_custom_call.1} parent=31 // pred_region
          %228 = dma.done %s221, 384
        $region36: #{tpu_custom_call.1} parent=31 // pred_fallthru
          _
        %s229 = sand.u32 %s78, 1
        %s230 = scalar_lea.sflag [#allocation7], %s229
        %s231 = sand.u32 %s78, 1
        %s232 = smul.addr %s231, 192
        %s233 = scalar_lea.vmem [#allocation6], %s232
        // Predicated region
        $region37: #{tpu_custom_call.1} parent=31 // pred_check
          %p234 = pneg %p91
        $region38: #{tpu_custom_call.1} parent=31 // pred_check_branch
          %236 = sbr.rel (%p234) target = $region40
        $region39: #{tpu_custom_call.1} parent=31 // pred_region
          %237 = dma.done %s230, 3072
        $region40: #{tpu_custom_call.1} parent=31 // pred_fallthru
          _
        %s238 = sand.u32 %s50, 1
        %s239 = scalar_lea.sflag [#allocation4], %s238
        %s240 = sand.u32 %s50, 1
        %s241 = smul.addr %s240, 24
        %s242 = scalar_lea.vmem [#allocation3], %s241
        %p243 = pneg %p63
        %p244 = pneg %p60
        %s245 = sand.u32 %s78, 1
        %s246 = scalar_lea.sflag [#allocation7], %s245
        %s247 = sand.u32 %s78, 1
        %s248 = smul.addr %s247, 192
        %s249 = scalar_lea.vmem [#allocation6], %s248
        %p250 = pneg %p91
        %p251 = pneg %p88
        %p252 = scmp.lt.s32.totalorder %s27, 0
        %s253 = scalar_select %p252, %s27, 0
        %s254 = scalar_lea.vmem %s2, %s253
        %p255 = pneg %p117
        %p256 = pneg %p114
        %p257 = pneg %p145
        %p258 = pneg %p142
        %s259 = smul.u32 3, %s28
        %s260 = smul.u32 48, %s28
        %p261 = scmp.lt.s32.totalorder %s27, 0
        %s262 = scalar_select %p261, %s27, 0
        %s263 = scalar_lea.vmem %s2, %s262
        %p265 = scmp.eq.s32.totalorder %s28, 0
        // Predicated region
        $region41: #{tpu_custom_call.1} parent=31 // pred_check
          %p266 = pneg %p265
        $region42: #{tpu_custom_call.1} parent=31 // pred_check_branch
          %268 = sbr.rel (%p266) target = $region44
        $region43: #{tpu_custom_call.1} parent=31 // pred_region
          %269 = vst [vmem:[#allocation2] sm:$0xff] 0.0
        $region44: #{tpu_custom_call.1} parent=31 // pred_fallthru
          _
        %v270 = vld [vmem:[#allocation2] sm:$0xff]
        %v271 = vld [vmem:[%s224] sm:$0xff]
        %v272 = vld [vmem:[%s224 + $0x8] sm:$0xff]
        %v273 = vld [vmem:[%s224 + $0x10] sm:$0xff]
        %v274 = vpack.c.bf16 %v271, %v271
        %v275 = vpack.c.bf16 %v272, %v272
        %v276 = vpack.c.bf16 %v273, %v273
        %v277 = vld [vmem:[%s233] sm:$0xf]
        %v278 = vld [vmem:[%s233 + $0x4] sm:$0xf]
        %v279 = vld [vmem:[%s233 + $0x8] sm:$0xf]
        %v280 = vld [vmem:[%s233 + $0xc] sm:$0xf]
        %v281 = vld [vmem:[%s233 + $0x10] sm:$0xf]
        %v282 = vld [vmem:[%s233 + $0x14] sm:$0xf]
        %v283 = vld [vmem:[%s233 + $0x18] sm:$0xf]
        %v284 = vld [vmem:[%s233 + $0x1c] sm:$0xf]
        %v285 = vld [vmem:[%s233 + $0x20] sm:$0xf]
        %v286 = vld [vmem:[%s233 + $0x24] sm:$0xf]
        %v287 = vld [vmem:[%s233 + $0x28] sm:$0xf]
        %v288 = vld [vmem:[%s233 + $0x2c] sm:$0xf]
        %v289 = vld [vmem:[%s233 + $0x30] sm:$0xf]
        %v290 = vld [vmem:[%s233 + $0x34] sm:$0xf]
        %v291 = vld [vmem:[%s233 + $0x38] sm:$0xf]
        %v292 = vld [vmem:[%s233 + $0x3c] sm:$0xf]
        %v293 = vld [vmem:[%s233 + $0x40] sm:$0xf]
        %v294 = vld [vmem:[%s233 + $0x44] sm:$0xf]
        %v295 = vld [vmem:[%s233 + $0x48] sm:$0xf]
        %v296 = vld [vmem:[%s233 + $0x4c] sm:$0xf]
        %v297 = vld [vmem:[%s233 + $0x50] sm:$0xf]
        %v298 = vld [vmem:[%s233 + $0x54] sm:$0xf]
        %v299 = vld [vmem:[%s233 + $0x58] sm:$0xf]
        %v300 = vld [vmem:[%s233 + $0x5c] sm:$0xf]
        %v301 = vld [vmem:[%s233 + $0x60] sm:$0xf]
        %v302 = vld [vmem:[%s233 + $0x64] sm:$0xf]
        %v303 = vld [vmem:[%s233 + $0x68] sm:$0xf]
        %v304 = vld [vmem:[%s233 + $0x6c] sm:$0xf]
        %v305 = vld [vmem:[%s233 + $0x70] sm:$0xf]
        %v306 = vld [vmem:[%s233 + $0x74] sm:$0xf]
        %v307 = vld [vmem:[%s233 + $0x78] sm:$0xf]
        %v308 = vld [vmem:[%s233 + $0x7c] sm:$0xf]
        %v309 = vld [vmem:[%s233 + $0x80] sm:$0xf]
        %v310 = vld [vmem:[%s233 + $0x84] sm:$0xf]
        %v311 = vld [vmem:[%s233 + $0x88] sm:$0xf]
        %v312 = vld [vmem:[%s233 + $0x8c] sm:$0xf]
        %v313 = vld [vmem:[%s233 + $0x90] sm:$0xf]
        %v314 = vld [vmem:[%s233 + $0x94] sm:$0xf]
        %v315 = vld [vmem:[%s233 + $0x98] sm:$0xf]
        %v316 = vld [vmem:[%s233 + $0x9c] sm:$0xf]
        %v317 = vld [vmem:[%s233 + $0xa0] sm:$0xf]
        %v318 = vld [vmem:[%s233 + $0xa4] sm:$0xf]
        %v319 = vld [vmem:[%s233 + $0xa8] sm:$0xf]
        %v320 = vld [vmem:[%s233 + $0xac] sm:$0xf]
        %v321 = vld [vmem:[%s233 + $0xb0] sm:$0xf]
        %v322 = vld [vmem:[%s233 + $0xb4] sm:$0xf]
        %v323 = vld [vmem:[%s233 + $0xb8] sm:$0xf]
        %v324 = vld [vmem:[%s233 + $0xbc] sm:$0xf]
        %v373 = vunpack.c.l.b16 %v277
        %v374 = vunpack.c.l.b16 %v278
        %v375 = vunpack.c.l.b16 %v279
        %v376 = vunpack.c.l.b16 %v280
        %v377 = vunpack.c.l.b16 %v281
        %v378 = vunpack.c.l.b16 %v282
        %v379 = vunpack.c.l.b16 %v283
        %v380 = vunpack.c.l.b16 %v284
        %v381 = vunpack.c.l.b16 %v285
        %v382 = vunpack.c.l.b16 %v286
        %v383 = vunpack.c.l.b16 %v287
        %v384 = vunpack.c.l.b16 %v288
        %v385 = vunpack.c.l.b16 %v289
        %v386 = vunpack.c.l.b16 %v290
        %v387 = vunpack.c.l.b16 %v291
        %v388 = vunpack.c.l.b16 %v292
        %v389 = vunpack.c.l.b16 %v293
        %v390 = vunpack.c.l.b16 %v294
        %v391 = vunpack.c.l.b16 %v295
        %v392 = vunpack.c.l.b16 %v296
        %v393 = vunpack.c.l.b16 %v297
        %v394 = vunpack.c.l.b16 %v298
        %v395 = vunpack.c.l.b16 %v299
        %v396 = vunpack.c.l.b16 %v300
        %v397 = vunpack.c.l.b16 %v301
        %v398 = vunpack.c.l.b16 %v302
        %v399 = vunpack.c.l.b16 %v303
        %v400 = vunpack.c.l.b16 %v304
        %v401 = vunpack.c.l.b16 %v305
        %v402 = vunpack.c.l.b16 %v306
        %v403 = vunpack.c.l.b16 %v307
        %v404 = vunpack.c.l.b16 %v308
        %v405 = vunpack.c.l.b16 %v309
        %v406 = vunpack.c.l.b16 %v310
        %v407 = vunpack.c.l.b16 %v311
        %v408 = vunpack.c.l.b16 %v312
        %v409 = vunpack.c.l.b16 %v313
        %v410 = vunpack.c.l.b16 %v314
        %v411 = vunpack.c.l.b16 %v315
        %v412 = vunpack.c.l.b16 %v316
        %v413 = vunpack.c.l.b16 %v317
        %v414 = vunpack.c.l.b16 %v318
        %v415 = vunpack.c.l.b16 %v319
        %v416 = vunpack.c.l.b16 %v320
        %v417 = vunpack.c.l.b16 %v321
        %v418 = vunpack.c.l.b16 %v322
        %v419 = vunpack.c.l.b16 %v323
        %v420 = vunpack.c.l.b16 %v324
        %v421 = vpack.c.b16 %v374, %v373
        %v422 = vpack.c.b16 %v376, %v375
        %v423 = vpack.c.b16 %v378, %v377
        %v424 = vpack.c.b16 %v380, %v379
        %v425 = vpack.c.b16 %v382, %v381
        %v426 = vpack.c.b16 %v384, %v383
        %v427 = vpack.c.b16 %v386, %v385
        %v428 = vpack.c.b16 %v388, %v387
        %v429 = vpack.c.b16 %v390, %v389
        %v430 = vpack.c.b16 %v392, %v391
        %v431 = vpack.c.b16 %v394, %v393
        %v432 = vpack.c.b16 %v396, %v395
        %v433 = vpack.c.b16 %v398, %v397
        %v434 = vpack.c.b16 %v400, %v399
        %v435 = vpack.c.b16 %v402, %v401
        %v436 = vpack.c.b16 %v404, %v403
        %v437 = vpack.c.b16 %v406, %v405
        %v438 = vpack.c.b16 %v408, %v407
        %v439 = vpack.c.b16 %v410, %v409
        %v440 = vpack.c.b16 %v412, %v411
        %v441 = vpack.c.b16 %v414, %v413
        %v442 = vpack.c.b16 %v416, %v415
        %v443 = vpack.c.b16 %v418, %v417
        %v444 = vpack.c.b16 %v420, %v419
        %469 = vmatprep.subr.bf16.mxu0 0
        %470 = vmatpush1.bf16.msra.mxu0 %v428
        %471 = vmatprep.subr.bf16.mxu0 0
        %472 = vmatpush1.bf16.msra.mxu0 %v427
        %473 = vmatprep.subr.bf16.mxu0 0
        %474 = vmatpush1.bf16.msra.mxu0 %v426
        %475 = vmatprep.subr.bf16.mxu0 0
        %476 = vmatpush1.bf16.msra.mxu0 %v425
        %477 = vmatprep.subr.bf16.mxu0 0
        %478 = vmatpush1.bf16.msra.mxu0 %v424
        %479 = vmatprep.subr.bf16.mxu0 0
        %480 = vmatpush1.bf16.msra.mxu0 %v423
        %481 = vmatprep.subr.bf16.mxu0 0
        %482 = vmatpush1.bf16.msra.mxu0 %v422
        %483 = vmatprep.subr.bf16.mxu0 0
        %484 = vmatpush1.bf16.msra.mxu0 %v421
        %485 = vmatprep.subr.bf16.mxu0 0
        %486 = vmatpush2.bf16.msra.mxu0 %v436
        %487 = vmatprep.subr.bf16.mxu0 0
        %488 = vmatpush2.bf16.msra.mxu0 %v435
        %489 = vmatprep.subr.bf16.mxu0 0
        %490 = vmatpush2.bf16.msra.mxu0 %v434
        %491 = vmatprep.subr.bf16.mxu0 0
        %492 = vmatpush2.bf16.msra.mxu0 %v433
        %493 = vmatprep.subr.bf16.mxu0 0
        %494 = vmatpush2.bf16.msra.mxu0 %v432
        %495 = vmatprep.subr.bf16.mxu0 0
        %496 = vmatpush2.bf16.msra.mxu0 %v431
        %497 = vmatprep.subr.bf16.mxu0 0
        %498 = vmatpush2.bf16.msra.mxu0 %v430
        %499 = vmatprep.subr.bf16.mxu0 0
        %500 = vmatpush2.bf16.msra.mxu0 %v429
        %501 = vmatprep.mubr.bf16.mxu0 %v275
        %502 = vmatmul.mubr.bf16.gmra.mxu0 %v274
        %v503 = vpop.f32.mrf.mxu0
        %v504 = vadd.f32 0.0, %v503
        %v505 = vpop.f32.mrf.mxu0
        %v506 = vpop.f32.mrf.mxu0
        %v507 = vpop.f32.mrf.mxu0
        %508 = vdwg.mxu0
        %509 = vmatprep.subr.bf16.mxu0 0
        %510 = vmatpush1.bf16.msra.mxu0 %v444
        %511 = vmatprep.subr.bf16.mxu0 0
        %512 = vmatpush1.bf16.msra.mxu0 %v443
        %513 = vmatprep.subr.bf16.mxu0 0
        %514 = vmatpush1.bf16.msra.mxu0 %v442
        %515 = vmatprep.subr.bf16.mxu0 0
        %516 = vmatpush1.bf16.msra.mxu0 %v441
        %517 = vmatprep.subr.bf16.mxu0 0
        %518 = vmatpush1.bf16.msra.mxu0 %v440
        %519 = vmatprep.subr.bf16.mxu0 0
        %520 = vmatpush1.bf16.msra.mxu0 %v439
        %521 = vmatprep.subr.bf16.mxu0 0
        %522 = vmatpush1.bf16.msra.mxu0 %v438
        %523 = vmatprep.subr.bf16.mxu0 0
        %524 = vmatpush1.bf16.msra.mxu0 %v437
        %525 = vmatprep.subr.bf16.mxu0 0
        %526 = vmatpush2.bf16.msra.mxu0 0
        %527 = vmatprep.subr.bf16.mxu0 0
        %528 = vmatpush2.bf16.msra.mxu0 0
        %529 = vmatprep.subr.bf16.mxu0 0
        %530 = vmatpush2.bf16.msra.mxu0 0
        %531 = vmatprep.subr.bf16.mxu0 0
        %532 = vmatpush2.bf16.msra.mxu0 0
        %533 = vmatprep.subr.bf16.mxu0 0
        %534 = vmatpush2.bf16.msra.mxu0 0
        %535 = vmatprep.subr.bf16.mxu0 0
        %536 = vmatpush2.bf16.msra.mxu0 0
        %537 = vmatprep.subr.bf16.mxu0 0
        %538 = vmatpush2.bf16.msra.mxu0 0
        %539 = vmatprep.subr.bf16.mxu0 0
        %540 = vmatpush2.bf16.msra.mxu0 0
        %541 = vmatprep.mubr.bf16.mxu0 0
        %542 = vmatmul.mubr.bf16.gmra.mxu0 %v276
        %v543 = vpop.f32.mrf.mxu0
        %v544 = vadd.f32 %v504, %v543
        %v545 = vpop.f32.mrf.mxu0
        %v546 = vpop.f32.mrf.mxu0
        %v547 = vpop.f32.mrf.mxu0
        %548 = vdwg.mxu0
        %v549 = vadd.f32 %v270, %v544
        %550 = vst [vmem:[#allocation2] sm:$0xff] %v549
        %p551 = scmp.eq.s32.totalorder %s28, 1
        // Predicated region
        $region45: #{tpu_custom_call.1} parent=31 // pred_check
          %p552 = pneg %p551
        $region46: #{tpu_custom_call.1} parent=31 // pred_check_branch
          %554 = sbr.rel (%p552) target = $region48
        $region47: #{tpu_custom_call.1} parent=31 // pred_region
          %v555 = vld [vmem:[#allocation2] sm:$0xff]
          %v556 = vld [vmem:[%s263] sm:$0x1]
          %v558 = vlaneseq
          %v559 = vshrl.u32 %v558, 7
          %v560 = vsub.s32 0, %v559
          %v561 = vrot.slane %v556, %v560
          %v563 = vadd.f32 %v555, %v561
          %564 = vst [vmem:[#allocation8] sm:$0xff] %v563
        $region48: #{tpu_custom_call.1} parent=31 // pred_fallthru
          _
        // Predicated region
        $region49: #{tpu_custom_call.1} parent=31 // pred_check
          %p565 = pneg %p142
        $region50: #{tpu_custom_call.1} parent=31 // pred_check_branch
          %567 = sbr.rel (%p565) target = $region52
        $region51: #{tpu_custom_call.1} parent=31 // pred_region
          %s569 = ssub.s32 128, 128
          %570 = vsyncadd [#allocation5], %s569
          %s571 = sadd.s32 %s27, %s26
          %s572 = smul.addr %s571, 128
          %s573 = scalar_lea.hbm %s3, %s572
          %s575 = sshll.u32 [#allocation8], 4
          %s576 = int_to_ptr.vmem [resolvable:$true] %s575
          %578 = dma.vmem_to_hbm [thread:$0]  %s576, 128, %s573, [#allocation5]
        $region52: #{tpu_custom_call.1} parent=31 // pred_fallthru
          _
        // Predicated region
        $region53: #{tpu_custom_call.1} parent=31 // pred_check
          %p579 = pneg %p142
        $region54: #{tpu_custom_call.1} parent=31 // pred_check_branch
          %581 = sbr.rel (%p579) target = $region56
        $region55: #{tpu_custom_call.1} parent=31 // pred_region
          %582 = dma.done [#allocation5], 128
        $region56: #{tpu_custom_call.1} parent=31 // pred_fallthru
          _
      $region32: #{tpu_custom_call.1} parent=5 // pred_fallthru
        _
      %p583 = scmp.le.s32.totalorder 2, %s16
      // Predicated region
      $region57: #{tpu_custom_call.1} parent=5 // pred_check
        %p584 = pneg %p583
      $region58: #{tpu_custom_call.1} parent=5 // pred_check_branch
        %586 = sbr.rel (%p584) target = $region60
      $region59: #{tpu_custom_call.1} parent=5 // pred_region
        %s587 = ssub.s32 %s16, 2
      $region60: #{tpu_custom_call.1} parent=5 // pred_fallthru
        _
    $region6: #{tpu_custom_call.1} parent=1 // loop_footer
      %s20 = sadd.s32 1, %s16
    $region7: #{tpu_custom_call.1} parent=1 // loop_footer_branch
      %15 = sbr.rel target = $region3
    $region8: #{tpu_custom_call.1} parent=1 // loop_exit
      _
    %588 = vsyncpa [#allocation4], 1
    %s589 = scalar_lea.sflag [#allocation4], 1
    %590 = vsyncpa %s589, 1
    %591 = vsyncpa [#allocation7], 1
    %s592 = scalar_lea.sflag [#allocation7], 1
    %593 = vsyncpa %s592, 1
    %594 = vsyncpa [#allocation5], 1
    %s595 = scalar_lea.sflag [#allocation5], 1
    %596 = vsyncpa %s595, 1

</llo_original>
